<compile_context>
chip_gen: v7x
topology: tpu7x:2x2x1
jax: 0.10.0
libtpu: 0.0.40
codegen_flags: <defaults>
</compile_context>

<pallas_src>
import functools

import jax
import jax.numpy as jnp
import numpy as np
from jax.experimental import pallas as pl
from jax.experimental.pallas import tpu as pltpu


def _gnet_loss_kernel(lp_ref, tg_ref, out_ref, *, shift, num_classes, block_rows,
                      batch, targets_normalized, class_chunk):
    i = pl.program_id(0)
    shift_f = jnp.float32(shift)
    need_den = (shift > 0.0) and (not targets_normalized)

    def chunk_sums(lp, tg):
        """Per-row numerator (and target row-sum if needed) for one class slab."""
        if shift > 0.0:
            # Fold the shift into the targets: one reduce instead of two.
            num = jnp.sum((tg + shift_f) * lp, axis=1, keepdims=True)
        else:
            num = jnp.sum(tg * lp, axis=1, keepdims=True)
        den = jnp.sum(tg, axis=1, keepdims=True) if need_den else None
        return num, den

    if class_chunk is None or class_chunk >= num_classes:
        # Whole (TB, C) tile at once; upcast in-kernel (bf16 transport, f32 math).
        lp = lp_ref[...].astype(jnp.float32)
        tg = tg_ref[...].astype(jnp.float32)
        num, den_t = chunk_sums(lp, tg)
    else:
        # Vocab-sized C: bound f32 intermediates to (TB, CK).
        n_chunks = num_classes // class_chunk

        def body(c, carry):
            num_acc, den_acc = carry
            start = pl.multiple_of(c * class_chunk, 128)
            lp = lp_ref[:, pl.ds(start, class_chunk)].astype(jnp.float32)
            tg = tg_ref[:, pl.ds(start, class_chunk)].astype(jnp.float32)
            n, d = chunk_sums(lp, tg)
            num_acc = num_acc + n
            if d is not None:
                den_acc = den_acc + d
            return (num_acc, den_acc)

        zeros = jnp.zeros((block_rows, 1), jnp.float32)
        num, den_acc = jax.lax.fori_loop(0, n_chunks, body, (zeros, zeros))
        den_t = den_acc if need_den else None

    # Row-validity mask, only materialized when the last block can be ragged.
    if batch % block_rows != 0:
        valid = (jax.lax.broadcasted_iota(jnp.int32, (block_rows, 1), 0)
                 + i * block_rows) < batch
    else:
        valid = None

    if shift > 0.0:
        if targets_normalized:
            # Rows of `targets` sum to 1 -> denominator is a compile-time constant.
            rows = num * jnp.float32(1.0 / (1.0 + num_classes * shift))
        else:
            den = den_t + jnp.float32(num_classes * shift)
            if valid is not None:
                den = jnp.where(valid, den, jnp.float32(1.0))  # keep division finite
            inv = pl.reciprocal(den, approx=True)              # EUP slot
            inv = inv * (jnp.float32(2.0) - den * inv)         # one Newton step
            rows = num * inv
    else:
        rows = num

    if valid is not None:
        rows = jnp.where(valid, rows, jnp.float32(0.0))        # zero padded rows

    partial = jnp.sum(rows)
    # Plain broadcast store into the lane-dense output tile (no iota/mask epilogue).
    out_ref[...] = jnp.full((1, 8, 128), partial, jnp.float32)


def _pick_block_rows(batch, num_classes, itemsize, max_block_rows=None,
                     target_bytes=2 * 1024 * 1024):
    """~2 MiB of transport per input block: 2 inputs x 2 pipeline buffers = 8 MiB,
    leaving headroom for the in-kernel f32 upcasts even on v5e's 16 MiB default
    scoped VMEM and v7x's 64 MiB physical VMEM."""
    if batch <= 8:
        return batch  # single tiny block; block dim equals the full array dim
    cap = max(8, target_bytes // max(1, num_classes * itemsize))
    if max_block_rows is not None:
        cap = min(cap, int(max_block_rows))
    if batch >= 16:
        # Always emit >= 2 grid steps so both v7x TensorCores get work.
        cap = min(cap, max(8, ((batch // 2) // 8) * 8))
    cap = min(cap, batch)
    return max(8, (cap // 8) * 8)


def gnet_loss(logprobs, targets, *, label_smoothing_mode="None",
              label_smoothing_rate=0.0, targets_normalized=False,
              max_block_rows=None, class_chunk=None):
    """Pallas implementation of CrossEntropyLoss.forward(logprobs, targets)."""
    assert logprobs.shape == targets.shape and logprobs.ndim == 2
    B, C = logprobs.shape

    if label_smoothing_mode == "None":
        shift = 0.0
    elif label_smoothing_mode == "Const":
        if not (0.0 <= label_smoothing_rate < 0.5):
            raise ValueError("'Const' label_smoothing_rate must be in [0, 0.5)")
        shift = float(label_smoothing_rate / (1.0 - 2.0 * label_smoothing_rate))
    elif label_smoothing_mode == "Random":
        # TODO(synk): 'Random' smoothing (abs(randn)*shift per element) needs
        # pltpu.prng_seed + pltpu.stateful_normal with an explicit seed; not implemented.
        raise NotImplementedError("label_smoothing_mode='Random' not implemented")
    else:
        raise ValueError(f"unknown label_smoothing_mode: {label_smoothing_mode}")

    lp_bytes = jnp.dtype(logprobs.dtype).itemsize
    tg_bytes = jnp.dtype(targets.dtype).itemsize
    tb = _pick_block_rows(B, C, max(lp_bytes, tg_bytes), max_block_rows)
    grid = (B + tb - 1) // tb  # ragged last block handled by in-kernel row mask

    # Auto-enable class chunking for vocab-sized C; keep chunks lane-aligned.
    if class_chunk is None and C >= 8192:
        for ck in (2048, 1024, 512, 256, 128):
            if C % ck == 0:
                class_chunk = ck
                break
    if class_chunk is not None and (class_chunk % 128 != 0 or C % class_chunk != 0
                                    or class_chunk >= C):
        class_chunk = None

    kernel = functools.partial(
        _gnet_loss_kernel, shift=shift, num_classes=C, block_rows=tb, batch=B,
        targets_normalized=targets_normalized, class_chunk=class_chunk)

    partials = pl.pallas_call(
        kernel,
        out_shape=jax.ShapeDtypeStruct((grid, 8, 128), jnp.float32),
        grid=(grid,),
        in_specs=[
            pl.BlockSpec((tb, C), lambda i: (i, 0)),
            pl.BlockSpec((tb, C), lambda i: (i, 0)),
        ],
        out_specs=pl.BlockSpec((1, 8, 128), lambda i: (i, 0, 0)),
        compiler_params=pltpu.CompilerParams(
            dimension_semantics=("parallel",),
            vmem_limit_bytes=32 * 1024 * 1024),
        cost_estimate=pl.CostEstimate(
            flops=3 * B * C,
            transcendentals=B if (shift > 0.0 and not targets_normalized) else 0,
            bytes_accessed=B * C * (lp_bytes + tg_bytes) + grid * 8 * 128 * 4),
    )(logprobs, targets)

    # Tiny final reduction in the wrapper (sign and 1/B live here).
    return -jnp.sum(partials[:, 0, 0]) / jnp.float32(B)


def gnet_loss_forward(inputs, targets, **kwargs):
    """GNetLoss.forward: inputs is a dict with key 'logprobs'."""
    return gnet_loss(inputs["logprobs"], targets, **kwargs)


def _reference(logprobs, targets, mode, rate):
    logprobs = logprobs.astype(jnp.float32)
    targets = targets.astype(jnp.float32)
    if mode == "None":
        shifted = targets
    else:
        shift = rate / (1.0 - 2.0 * rate)
        shifted = targets + shift
        shifted = shifted / shifted.sum(axis=1, keepdims=True)
    return -jnp.sum(shifted * logprobs) / logprobs.shape[0]


if __name__ == "__main__":
    key = jax.random.PRNGKey(0)
    k1, k2, k3, k4, k5, k6 = jax.random.split(key, 6)

    B, C = 32, 128
    logits = jax.random.normal(k1, (B, C), dtype=jnp.float32)
    logprobs = jax.nn.log_softmax(logits, axis=-1)
    targets = jax.nn.softmax(jax.random.normal(k2, (B, C), dtype=jnp.float32), axis=-1)

    mode, rate = "Const", 0.1
    ref = _reference(logprobs, targets, mode, rate)

    # --- 'Const' smoothing, forced TB=8 -> grid=4, exact-denominator path ------
    loss = jax.block_until_ready(gnet_loss_forward(
        {"logprobs": logprobs}, targets, label_smoothing_mode=mode,
        label_smoothing_rate=rate, max_block_rows=8))
    np.testing.assert_allclose(np.asarray(loss), np.asarray(ref), rtol=1e-5, atol=1e-5)

    # --- default tiling (>=2 grid steps) + normalized-targets fast path --------
    loss_n = jax.block_until_ready(gnet_loss(
        logprobs, targets, label_smoothing_mode=mode, label_smoothing_rate=rate,
        targets_normalized=True))
    np.testing.assert_allclose(np.asarray(loss_n), np.asarray(ref), rtol=1e-5, atol=1e-5)

    # --- 'None' path ------------------------------------------------------------
    loss_none = jax.block_until_ready(
        gnet_loss(logprobs, targets, label_smoothing_mode="None"))
    np.testing.assert_allclose(np.asarray(loss_none),
                               np.asarray(_reference(logprobs, targets, "None", 0.0)),
                               rtol=1e-5, atol=1e-5)

    # --- bf16 transport (native dtype over HBM, f32 math in-kernel) ------------
    lp_bf16 = logprobs.astype(jnp.bfloat16)
    tg_bf16 = targets.astype(jnp.bfloat16)
    loss_bf16 = jax.block_until_ready(gnet_loss(
        lp_bf16, tg_bf16, label_smoothing_mode=mode, label_smoothing_rate=rate,
        max_block_rows=8))
    np.testing.assert_allclose(np.asarray(loss_bf16),
                               np.asarray(_reference(lp_bf16, tg_bf16, mode, rate)),
                               rtol=2e-2, atol=2e-2)

    # --- ragged batch (B=13 -> TB=8, grid=2, masked last block) -----------------
    Br = 13
    lp_r = jax.nn.log_softmax(jax.random.normal(k3, (Br, C), dtype=jnp.float32), axis=-1)
    tg_r = jax.nn.softmax(jax.random.normal(k4, (Br, C), dtype=jnp.float32), axis=-1)
    loss_r = jax.block_until_ready(gnet_loss(
        lp_r, tg_r, label_smoothing_mode=mode, label_smoothing_rate=rate))
    np.testing.assert_allclose(np.asarray(loss_r),
                               np.asarray(_reference(lp_r, tg_r, mode, rate)),
                               rtol=1e-5, atol=1e-5)

    # --- class-chunked path (C=512, chunk=128 forced) ---------------------------
    B2, C2 = 16, 512
    lp2 = jax.nn.log_softmax(jax.random.normal(k5, (B2, C2), dtype=jnp.float32), axis=-1)
    tg2 = jax.nn.softmax(jax.random.normal(k6, (B2, C2), dtype=jnp.float32), axis=-1)
    loss_c = jax.block_until_ready(gnet_loss(
        lp2, tg2, label_smoothing_mode=mode, label_smoothing_rate=rate, class_chunk=128))
    np.testing.assert_allclose(np.asarray(loss_c),
                               np.asarray(_reference(lp2, tg2, mode, rate)),
                               rtol=1e-5, atol=1e-5)

    print("KERNEL_OK")
</pallas_src>

<mosaic_0001>
module attributes {stable_mosaic.version = 11 : i64} {
  func.func @_gnet_loss_kernel(%arg0: i32, %arg1: memref<8x128xf32, #tpu.memory_space<vmem>>, %arg2: memref<8x128xf32, #tpu.memory_space<vmem>>, %arg3: memref<1x8x128xf32, #tpu.memory_space<vmem>>) attributes {dimension_semantics = [#tpu.dimension_semantics<parallel>], iteration_bounds = array<i64: 4>, scalar_prefetch = 0 : i64, scratch_operands = 0 : i64, tpu.core_type = #tpu.core_type<tc>, window_params = [{transform_indices = @transform_0, window_bounds = array<i64: 8, 128>}, {transform_indices = @transform_1, window_bounds = array<i64: 8, 128>}, {transform_indices = @transform_2, window_bounds = array<i64: 1, 8, 128>}]} {
    %c0 = arith.constant 0 : index
    %c0_0 = arith.constant 0 : index
    %0 = vector.load %arg1[%c0, %c0_0] : memref<8x128xf32, #tpu.memory_space<vmem>>, vector<8x128xf32>
    %c0_1 = arith.constant 0 : index
    %c0_2 = arith.constant 0 : index
    %1 = vector.load %arg2[%c0_1, %c0_2] : memref<8x128xf32, #tpu.memory_space<vmem>>, vector<8x128xf32>
    %cst = arith.constant 1.250000e-01 : f32
    %2 = vector.broadcast %cst : f32 to vector<8x128xf32>
    %3 = arith.addf %1, %2 : vector<8x128xf32>
    %4 = arith.mulf %3, %0 : vector<8x128xf32>
    %cst_3 = arith.constant dense<0.000000e+00> : vector<8xf32>
    %5 = vector.multi_reduction <add>, %4, %cst_3 [1] : vector<8x128xf32> to vector<8xf32>
    %6 = vector.shape_cast %5 : vector<8xf32> to vector<8x1xf32>
    %cst_4 = arith.constant dense<0.000000e+00> : vector<8xf32>
    %7 = vector.multi_reduction <add>, %1, %cst_4 [1] : vector<8x128xf32> to vector<8xf32>
    %8 = vector.shape_cast %7 : vector<8xf32> to vector<8x1xf32>
    %cst_5 = arith.constant 1.600000e+01 : f32
    %9 = vector.broadcast %cst_5 : f32 to vector<8x1xf32>
    %10 = arith.addf %8, %9 : vector<8x1xf32>
    %11 = tpu.reciprocal %10 {approx = true} : vector<8x1xf32> -> vector<8x1xf32>
    %12 = arith.mulf %10, %11 : vector<8x1xf32>
    %cst_6 = arith.constant 2.000000e+00 : f32
    %13 = vector.broadcast %cst_6 : f32 to vector<8x1xf32>
    %14 = arith.subf %13, %12 : vector<8x1xf32>
    %15 = arith.mulf %11, %14 : vector<8x1xf32>
    %16 = arith.mulf %6, %15 : vector<8x1xf32>
    %17 = vector.shape_cast %16 : vector<8x1xf32> to vector<1x8x1xf32>
    %cst_7 = arith.constant dense<0.000000e+00> : vector<1xf32>
    %18 = vector.multi_reduction <add>, %17, %cst_7 [1, 2] : vector<1x8x1xf32> to vector<1xf32>
    %19 = vector.shape_cast %18 : vector<1xf32> to vector<1x1x1xf32>
    %20 = vector.extract %19[0, 0, 0] : f32 from vector<1x1x1xf32>
    %21 = vector.broadcast %20 : f32 to vector<1x8x128xf32>
    %c0_8 = arith.constant 0 : index
    %c0_9 = arith.constant 0 : index
    %c0_10 = arith.constant 0 : index
    %22 = vector.load %arg3[%c0_8, %c0_9, %c0_10] : memref<1x8x128xf32, #tpu.memory_space<vmem>>, vector<1x8x128xf32>
    tpu.vector_store %arg3[%c0_8, %c0_9, %c0_10], %21 {strides = array<i32>} : memref<1x8x128xf32, #tpu.memory_space<vmem>>, vector<1x8x128xf32>,
    return
  }
  func.func @transform_0(%arg0: i32) -> (i32, i32) {
    %c0_i32 = arith.constant 0 : i32
    %c0_i32_0 = arith.constant 0 : i32
    return %arg0, %c0_i32 : i32, i32
  }
  func.func @transform_1(%arg0: i32) -> (i32, i32) {
    %c0_i32 = arith.constant 0 : i32
    %c0_i32_0 = arith.constant 0 : i32
    return %arg0, %c0_i32 : i32, i32
  }
  func.func @transform_2(%arg0: i32) -> (i32, i32, i32) {
    %c0_i32 = arith.constant 0 : i32
    %c0_i32_0 = arith.constant 0 : i32
    %c0_i32_1 = arith.constant 0 : i32
    return %arg0, %c0_i32, %c0_i32_0 : i32, i32, i32
  }
}

</mosaic_0001>

<llo_original>
// kernel: tpu_custom_call.1
$region0: #{tpu_custom_call.1}
  #allocation0 [shape = 'u32[]', space=smem, size = 0x4, offset = 0x4, fixed_abs, tag = 'smem constant byte address 0x4 - core index']
  #allocation1 [shape = 'u32[144,128]{1,0:T(1,128)}', space=vmem, size = 0x12000, scoped, tag = 'internal scratch']
  %s0 = inlined_call_operand.hbm [shape: f32[32,128], index: 0, kind: input, shape index: {}]
  %s1 = inlined_call_operand.hbm [shape: f32[32,128], index: 1, kind: input, shape index: {}]
  %s2 = inlined_call_operand.hbm [shape: f32[4,8,128], index: 2, kind: output, shape index: {}]
  %s3 = sld [smem:[#allocation0]]
  $region49: #{tpu_custom_call.1} parent=0
    _
  %s5 = ssub.s32 1, %s3
  %s6 = scalar_select 0, %s5, %s3
  $region1: #{tpu_custom_call.1} parent=0
    #allocation2 [shape = 'u8[8192]{0}', space=vmem, size = 0x2000, scoped, tag = 'input window, operand 0']
    #allocation3 [shape = 's32[2]{0}', space=sflag, size = 0x8, scoped, tag = 'scoped memory for tpu_custom_call.1']
    #allocation4 [shape = 's32[2]{0}', space=sflag, size = 0x8, scoped, tag = 'scoped memory for tpu_custom_call.1']
    #allocation5 [shape = 'u8[8192]{0}', space=vmem, size = 0x2000, scoped, tag = 'input window, operand 1']
    #allocation6 [shape = 's32[2]{0}', space=sflag, size = 0x8, scoped, tag = 'scoped memory for tpu_custom_call.1']
    #allocation7 [shape = 'u8[8192]{0}', space=vmem, size = 0x2000, scoped, tag = 'output window, operand 0']
    %7 = vsyncpa [#allocation3], 0
    %s8 = scalar_lea.sflag [#allocation3], 1
    %9 = vsyncpa %s8, 0
    %10 = vsyncpa [#allocation6], 0
    %s11 = scalar_lea.sflag [#allocation6], 1
    %12 = vsyncpa %s11, 0
    %13 = vsyncpa [#allocation4], 0
    %s14 = scalar_lea.sflag [#allocation4], 1
    %15 = vsyncpa %s14, 0
    loop: start=0, step=1, limit=6
    $region2: #{tpu_custom_call.1} parent=1 // loop_pre_header
      _
    $region3: #{tpu_custom_call.1} parent=1 // loop_header
      %s17 = sphi 0, %s21
      %p18 = scmp.ge.s32.totalorder %s17, 6
      %s27 = sphi 0, %s29
      %s30 = sphi 0, %s27
      %s31 = sphi 0, %s30
      %s47 = sphi 0, %s31
      %s53 = sphi 0, %s55
      %s56 = sphi 0, %s53
      %s57 = sphi 0, %s56
      %s73 = sphi 0, %s57
      %s79 = sphi 0, %s81
      %s82 = sphi 0, %s79
      %s83 = sphi 0, %s82
      %s99 = sphi 0, %s83
    $region4: #{tpu_custom_call.1} parent=1 // loop_header_branch
      %20 = sbr.rel (%p18) target = $region8
    $region5: #{tpu_custom_call.1} parent=1 // loop_body
      %s22 = ssub.s32 %s17, 1
      %s23 = ssub.s32 %s17, 2
      %s24 = sadd.s32 %s17, 1
      %s25 = ssub.s32 %s17, %s24
      %p26 = scmp.eq.s32.totalorder %s25, 0
      %s28 = sadd.s32 %s27, 1
      %s29 = scalar_select %p26, %s27, %s28
      %p32 = pneg %p26
      %p33 = scmp.eq.s32.totalorder %s17, 3
      %p34 = por %p32, %p33
      %p35 = scmp.ne.s32.totalorder %s27, %s30
      %p36 = scmp.eq.s32.totalorder %s17, 0
      %p37 = por %p35, %p36
      %p38 = scmp.ne.s32.totalorder %s27, %s30
      %p39 = scmp.eq.s32.totalorder %s22, 3
      %p40 = por %p38, %p39
      %p41 = scmp.ne.s32.totalorder %s30, %s31
      %p42 = scmp.eq.s32.totalorder %s22, 0
      %p43 = por %p41, %p42
      %p44 = scmp.ne.s32.totalorder %s30, %s31
      %p45 = scmp.eq.s32.totalorder %s23, 3
      %p46 = por %p44, %p45
      %p48 = scmp.ne.s32.totalorder %s31, %s47
      %p49 = scmp.eq.s32.totalorder %s23, 0
      %p50 = por %p48, %p49
      %s51 = ssub.s32 %s17, %s24
      %p52 = scmp.eq.s32.totalorder %s51, 0
      %s54 = sadd.s32 %s53, 1
      %s55 = scalar_select %p52, %s53, %s54
      %p58 = pneg %p52
      %p59 = scmp.eq.s32.totalorder %s17, 3
      %p60 = por %p58, %p59
      %p61 = scmp.ne.s32.totalorder %s53, %s56
      %p62 = scmp.eq.s32.totalorder %s17, 0
      %p63 = por %p61, %p62
      %p64 = scmp.ne.s32.totalorder %s53, %s56
      %p65 = scmp.eq.s32.totalorder %s22, 3
      %p66 = por %p64, %p65
      %p67 = scmp.ne.s32.totalorder %s56, %s57
      %p68 = scmp.eq.s32.totalorder %s22, 0
      %p69 = por %p67, %p68
      %p70 = scmp.ne.s32.totalorder %s56, %s57
      %p71 = scmp.eq.s32.totalorder %s23, 3
      %p72 = por %p70, %p71
      %p74 = scmp.ne.s32.totalorder %s57, %s73
      %p75 = scmp.eq.s32.totalorder %s23, 0
      %p76 = por %p74, %p75
      %s77 = ssub.s32 %s17, %s24
      %p78 = scmp.eq.s32.totalorder %s77, 0
      %s80 = sadd.s32 %s79, 1
      %s81 = scalar_select %p78, %s79, %s80
      %p84 = pneg %p78
      %p85 = scmp.eq.s32.totalorder %s17, 3
      %p86 = por %p84, %p85
      %p87 = scmp.ne.s32.totalorder %s79, %s82
      %p88 = scmp.eq.s32.totalorder %s17, 0
      %p89 = por %p87, %p88
      %p90 = scmp.ne.s32.totalorder %s79, %s82
      %p91 = scmp.eq.s32.totalorder %s22, 3
      %p92 = por %p90, %p91
      %p93 = scmp.ne.s32.totalorder %s82, %s83
      %p94 = scmp.eq.s32.totalorder %s22, 0
      %p95 = por %p93, %p94
      %p96 = scmp.ne.s32.totalorder %s82, %s83
      %p97 = scmp.eq.s32.totalorder %s23, 3
      %p98 = por %p96, %p97
      %p100 = scmp.ne.s32.totalorder %s83, %s99
      %p101 = scmp.eq.s32.totalorder %s23, 0
      %p102 = por %p100, %p101
      %p103 = scmp.le.s32.totalorder 1, %s17
      %p104 = scmp.lt.s32.totalorder %s17, 5
      %p105 = pnand %p103, %p104
      %p106 = pneg %p105
      // Predicated region
      $region9: #{tpu_custom_call.1} parent=5 // pred_check
        _
      $region10: #{tpu_custom_call.1} parent=5 // pred_check_branch
        %108 = sbr.rel (%p105) target = $region12
      $region11: #{tpu_custom_call.1} parent=5 // pred_region
        %s109 = ssub.s32 %s17, 1
      $region12: #{tpu_custom_call.1} parent=5 // pred_fallthru
        _
      %p110 = scmp.lt.s32.totalorder %s17, 4
      // Predicated region
      $region13: #{tpu_custom_call.1} parent=5 // pred_check
        %p111 = pneg %p110
      $region14: #{tpu_custom_call.1} parent=5 // pred_check_branch
        %113 = sbr.rel (%p111) target = $region16
      $region15: #{tpu_custom_call.1} parent=5 // pred_region
        // Predicated region
        $region17: #{tpu_custom_call.1} parent=15 // pred_check
          %p114 = pneg %p37
        $region18: #{tpu_custom_call.1} parent=15 // pred_check_branch
          %116 = sbr.rel (%p114) target = $region20
        $region19: #{tpu_custom_call.1} parent=15 // pred_region
          %s117 = sand.u32 %s27, 1
          %s118 = scalar_lea.sflag [#allocation3], %s117
          %s119 = sand.u32 %s27, 1
          %s120 = smul.addr %s119, 8
          %s121 = scalar_lea.vmem [#allocation2], %s120
          %s123 = ssub.s32 128, 128
          %124 = vsyncadd %s118, %s123
          %s125 = smul.addr %s17, 128
          %s126 = scalar_lea.hbm %s0, %s125
          %s128 = sshll.u32 %s121, 4
          %s129 = int_to_ptr.vmem [resolvable:$true] %s128
          %131 = dma.hbm_to_vmem [thread:$0]  %s126, 128, %s129, %s118
        $region20: #{tpu_custom_call.1} parent=15 // pred_fallthru
          _
        // Predicated region
        $region21: #{tpu_custom_call.1} parent=15 // pred_check
          %p132 = pneg %p63
        $region22: #{tpu_custom_call.1} parent=15 // pred_check_branch
          %134 = sbr.rel (%p132) target = $region24
        $region23: #{tpu_custom_call.1} parent=15 // pred_region
          %s135 = sand.u32 %s53, 1
          %s136 = scalar_lea.sflag [#allocation6], %s135
          %s137 = sand.u32 %s53, 1
          %s138 = smul.addr %s137, 8
          %s139 = scalar_lea.vmem [#allocation5], %s138
          %s141 = ssub.s32 128, 128
          %142 = vsyncadd %s136, %s141
          %s143 = smul.addr %s17, 128
          %s144 = scalar_lea.hbm %s1, %s143
          %s146 = sshll.u32 %s139, 4
          %s147 = int_to_ptr.vmem [resolvable:$true] %s146
          %149 = dma.hbm_to_vmem [thread:$0]  %s144, 128, %s147, %s136
        $region24: #{tpu_custom_call.1} parent=15 // pred_fallthru
          _
      $region16: #{tpu_custom_call.1} parent=5 // pred_fallthru
        _
      %p150 = scmp.le.s32.totalorder 1, %s17
      %p151 = scmp.lt.s32.totalorder %s17, 5
      %p152 = pnand %p150, %p151
      %p153 = pneg %p152
      // Predicated region
      $region25: #{tpu_custom_call.1} parent=5 // pred_check
        _
      $region26: #{tpu_custom_call.1} parent=5 // pred_check_branch
        %155 = sbr.rel (%p152) target = $region28
      $region27: #{tpu_custom_call.1} parent=5 // pred_region
        %s156 = ssub.s32 %s17, 1
        %s157 = sand.u32 %s30, 1
        %s158 = scalar_lea.sflag [#allocation3], %s157
        %s159 = sand.u32 %s30, 1
        %s160 = smul.addr %s159, 8
        %s161 = scalar_lea.vmem [#allocation2], %s160
        // Predicated region
        $region29: #{tpu_custom_call.1} parent=27 // pred_check
          %p162 = pneg %p43
        $region30: #{tpu_custom_call.1} parent=27 // pred_check_branch
          %164 = sbr.rel (%p162) target = $region32
        $region31: #{tpu_custom_call.1} parent=27 // pred_region
          %165 = dma.done %s158, 128
        $region32: #{tpu_custom_call.1} parent=27 // pred_fallthru
          _
        %s166 = sand.u32 %s56, 1
        %s167 = scalar_lea.sflag [#allocation6], %s166
        %s168 = sand.u32 %s56, 1
        %s169 = smul.addr %s168, 8
        %s170 = scalar_lea.vmem [#allocation5], %s169
        // Predicated region
        $region33: #{tpu_custom_call.1} parent=27 // pred_check
          %p171 = pneg %p69
        $region34: #{tpu_custom_call.1} parent=27 // pred_check_branch
          %173 = sbr.rel (%p171) target = $region36
        $region35: #{tpu_custom_call.1} parent=27 // pred_region
          %174 = dma.done %s167, 128
        $region36: #{tpu_custom_call.1} parent=27 // pred_fallthru
          _
        %s175 = sand.u32 %s30, 1
        %s176 = scalar_lea.sflag [#allocation3], %s175
        %s177 = sand.u32 %s30, 1
        %s178 = smul.addr %s177, 8
        %s179 = scalar_lea.vmem [#allocation2], %s178
        %p180 = pneg %p43
        %p181 = pneg %p40
        %s182 = sand.u32 %s56, 1
        %s183 = scalar_lea.sflag [#allocation6], %s182
        %s184 = sand.u32 %s56, 1
        %s185 = smul.addr %s184, 8
        %s186 = scalar_lea.vmem [#allocation5], %s185
        %p187 = pneg %p69
        %p188 = pneg %p66
        %p189 = pneg %p95
        %p190 = pneg %p92
        %s191 = sand.u32 %s82, 1
        %s192 = scalar_lea.sflag [#allocation4], %s191
        %s193 = sand.u32 %s82, 1
        %s194 = smul.addr %s193, 8
        %s195 = scalar_lea.vmem [#allocation7], %s194
        %v196 = vld [vmem:[%s161] sm:$0xff]
        %v197 = vld [vmem:[%s170] sm:$0xff]
        %v198 = vadd.f32 %v197, 0.125
        %v199 = vmul.f32 %v198, %v196
        %200 = vadd.xlane.f32.xlu0 %v199
        %v201 = vpop.xlane.xlu0 %200
        %202 = vadd.xlane.f32.xlu0 %v197
        %v203 = vpop.xlane.xlu0 %202
        %v204 = vadd.f32 %v203, 16.0
        %v205 = vrcp.pop %v204
        %v206 = vmul.f32 %v204, %v205
        %v207 = vsub.f32 2.0, %v206
        %v208 = vmul.f32 %v205, %v207
        %v209 = vmul.f32 %v201, %v208
        %vm210 = vcmask 7168
        %v211 = vsel %vm210, %v209, 0.0
        %212 = vadd.xlane.f32.xlu0 %v211
        %v213 = vpop.xlane.xlu0 %212
        %v214 = vrot.slane %v213, 4
        %v215 = vadd.f32 %v213, %v214
        %v216 = vrot.slane %v215, 2
        %v217 = vadd.f32 %v215, %v216
        %v218 = vrot.slane %v217, 1
        %v219 = vadd.f32 %v217, %v218
        %s220 = vtos %v219
        %v221 = vstv %s220
        %222 = vst [vmem:[%s195] sm:$0xff] %v221
        %s223 = sand.u32 %s82, 1
        %s224 = scalar_lea.sflag [#allocation4], %s223
        %s225 = sand.u32 %s82, 1
        %s226 = smul.addr %s225, 8
        %s227 = scalar_lea.vmem [#allocation7], %s226
        // Predicated region
        $region37: #{tpu_custom_call.1} parent=27 // pred_check
          %p228 = pneg %p92
        $region38: #{tpu_custom_call.1} parent=27 // pred_check_branch
          %230 = sbr.rel (%p228) target = $region40
        $region39: #{tpu_custom_call.1} parent=27 // pred_region
          %s232 = ssub.s32 128, 128
          %233 = vsyncadd %s224, %s232
          %s234 = smul.addr %s22, 128
          %s235 = scalar_lea.hbm %s2, %s234
          %s237 = sshll.u32 %s227, 4
          %s238 = int_to_ptr.vmem [resolvable:$true] %s237
          %240 = dma.vmem_to_hbm [thread:$0]  %s238, 128, %s235, %s224
        $region40: #{tpu_custom_call.1} parent=27 // pred_fallthru
          _
      $region28: #{tpu_custom_call.1} parent=5 // pred_fallthru
        _
      %p241 = scmp.le.s32.totalorder 2, %s17
      // Predicated region
      $region41: #{tpu_custom_call.1} parent=5 // pred_check
        %p242 = pneg %p241
      $region42: #{tpu_custom_call.1} parent=5 // pred_check_branch
        %244 = sbr.rel (%p242) target = $region44
      $region43: #{tpu_custom_call.1} parent=5 // pred_region
        %s245 = ssub.s32 %s17, 2
        // Predicated region
        $region45: #{tpu_custom_call.1} parent=43 // pred_check
          %p246 = pneg %p98
        $region46: #{tpu_custom_call.1} parent=43 // pred_check_branch
          %248 = sbr.rel (%p246) target = $region48
        $region47: #{tpu_custom_call.1} parent=43 // pred_region
          %s249 = sand.u32 %s83, 1
          %s250 = scalar_lea.sflag [#allocation4], %s249
          %s251 = sand.u32 %s83, 1
          %s252 = smul.addr %s251, 8
          %s253 = scalar_lea.vmem [#allocation7], %s252
          %254 = dma.done %s250, 128
        $region48: #{tpu_custom_call.1} parent=43 // pred_fallthru
          _
      $region44: #{tpu_custom_call.1} parent=5 // pred_fallthru
        _
    $region6: #{tpu_custom_call.1} parent=1 // loop_footer
      %s21 = sadd.s32 1, %s17
    $region7: #{tpu_custom_call.1} parent=1 // loop_footer_branch
      %16 = sbr.rel target = $region3
    $region8: #{tpu_custom_call.1} parent=1 // loop_exit
      _
    %255 = vsyncpa [#allocation3], 1
    %s256 = scalar_lea.sflag [#allocation3], 1
    %257 = vsyncpa %s256, 1
    %258 = vsyncpa [#allocation6], 1
    %s259 = scalar_lea.sflag [#allocation6], 1
    %260 = vsyncpa %s259, 1
    %261 = vsyncpa [#allocation4], 1
    %s262 = scalar_lea.sflag [#allocation4], 1
    %263 = vsyncpa %s262, 1

</llo_original>
